<compile_context>
chip_gen: v5e
topology: v5e:2x2
jax: 0.10.0
libtpu: 0.0.40
codegen_flags: <defaults>
</compile_context>

<pallas_src>
import functools

import jax
import jax.numpy as jnp
from jax.experimental import pallas as pl
from jax.experimental.pallas import tpu as pltpu

_BN_EPS = 1e-5


# ------------------------- Pass A: batch statistics -------------------------
def _stats_kernel(x_ref, sum_ref, sq_ref, *, hw, hw_tile, ragged):
    """Per-N accumulation of per-channel sum / sum-of-squares across HW tiles."""
    t = pl.program_id(1)

    @pl.when(t == 0)
    def _():
        sum_ref[...] = jnp.zeros_like(sum_ref)
        sq_ref[...] = jnp.zeros_like(sq_ref)

    x = x_ref[0].astype(jnp.float32)                        # (C, hw_tile)
    if ragged:
        # Last HW tile extends past the array edge: zero the out-of-range lanes
        # before they enter the sums.  (Pass B edge lanes are simply not written
        # back by the block machinery, so it needs no mask.)
        valid = hw - t * hw_tile
        lane = jax.lax.broadcasted_iota(jnp.int32, x.shape, dimension=1)
        x = jnp.where(lane < valid, x, 0.0)

    sum_ref[0] += jnp.sum(x, axis=-1, keepdims=True)        # (C, 1)
    sq_ref[0] += jnp.sum(x * x, axis=-1, keepdims=True)     # (C, 1)


# ----------------- Pass B: BN-folded 1x1 conv (compactor) -------------------
def _compact_kernel(x_ref, w_ref, b_ref, o_ref):
    """out = W_fold @ x_tile + b_fold   (BN already folded into W_fold/b_fold)."""
    x = x_ref[0]                                            # (C_in, hw_tile)
    if x.dtype != w_ref.dtype:
        x = x.astype(w_ref.dtype)                           # no-op for f32/bf16 inputs
    out = jnp.dot(w_ref[...], x, preferred_element_type=jnp.float32)
    o_ref[0] = (out + b_ref[...]).astype(o_ref.dtype)       # (C_out, hw_tile)


# --------------------------------- helpers ----------------------------------
def _tpu_vmem_capacity_bytes():
    """Per-TensorCore VMEM; falls back to the smallest (v7x, 64 MiB) if unknown."""
    try:
        info = pltpu.get_tpu_info()
        cap = getattr(info, "vmem_capacity_bytes", None)
        if cap:
            return int(cap)
    except Exception:
        pass
    return 64 << 20


def _pick_hw_tile(hw, c, itemsize, target_bytes):
    """Lane tile: multiple of 128 (or the full HW dim), sized to ~target_bytes.

    Prefers an exact divisor of HW (no ragged edge); otherwise returns the largest
    128-multiple <= target and the caller runs a cdiv grid with a masked edge.
    """
    row_bytes = max(1, c * itemsize)
    if hw < 128 or hw * row_bytes <= target_bytes:
        return hw                                   # single full-HW tile per step
    max_lanes = max(128, (target_bytes // row_bytes) // 128 * 128)
    max_lanes = min(max_lanes, hw // 128 * 128)
    best_div = 0
    for t in range(128, max_lanes + 1, 128):
        if hw % t == 0:
            best_div = t
    if best_div >= max(128, max_lanes // 2):
        return best_div                              # clean divisor, no ragged edge
    return max_lanes                                 # ragged edge, masked in Pass A


def _vmem_limit(need_bytes, vmem_cap_bytes):
    # Explicit scoped-VMEM budget: requested buffers + headroom, capped at 3/4 of the
    # physical per-TC VMEM (48 MiB on v7x, 96 MiB on v5e/v6e).
    cap = (vmem_cap_bytes * 3) // 4
    return int(min(max(need_bytes + (4 << 20), 16 << 20), cap))


# --------------------------------- wrapper ----------------------------------
def insert_compactor_forward(x_nchw, bn_gamma, bn_beta, compactor_weight, eps=_BN_EPS):
    """Forward of InsertCompactor.

    x_nchw:            (N, C, H, W)
    bn_gamma, bn_beta: (C,)
    compactor_weight:  (C, C, 1, 1)  (out_channels, in_channels, 1, 1)
    returns:           (N, C, H, W)
    """
    n, c, h, w = x_nchw.shape
    hw = h * w
    itemsize = x_nchw.dtype.itemsize

    # (N, C, H, W) -> (N, C, H*W): pure reshape, no extra HBM pass.
    x3d = x_nchw.reshape(n, c, hw)

    # bf16 inputs feed the MXU natively in bf16 (f32 accumulation); else f32.
    mxu_dtype = jnp.bfloat16 if x_nchw.dtype == jnp.bfloat16 else jnp.float32
    w_itemsize = jnp.dtype(mxu_dtype).itemsize
    w_bytes = c * c * w_itemsize

    vmem_cap = _tpu_vmem_capacity_bytes()
    # Bigger tiles on 128 MiB parts (v5e/v6e); conservative on v7x (64 MiB / TC).
    gen_target = (8 << 20) if vmem_cap >= (100 << 20) else (2 << 20)
    # Pass B holds 2x(in tile) + 2x(out tile) + 2x(weight block); keep inside the cap.
    avail = (vmem_cap * 3) // 4 - 2 * w_bytes - (8 << 20)
    target_bytes = max(min(gen_target, avail // 4), 128 * c * itemsize)

    hw_tile = _pick_hw_tile(hw, c, itemsize, target_bytes)
    num_t = -(-hw // hw_tile)
    ragged = (hw % hw_tile) != 0
    tile_bytes = c * hw_tile * itemsize

    # ---- Pass A: per-N per-channel sum / sum-of-squares (both TCs on v7x) ----
    part_sum, part_sq = pl.pallas_call(
        functools.partial(_stats_kernel, hw=hw, hw_tile=hw_tile, ragged=ragged),
        out_shape=(
            jax.ShapeDtypeStruct((n, c, 1), jnp.float32),
            jax.ShapeDtypeStruct((n, c, 1), jnp.float32),
        ),
        grid=(n, num_t),
        in_specs=[pl.BlockSpec((1, c, hw_tile), lambda i, t: (i, 0, t))],
        out_specs=(
            pl.BlockSpec((1, c, 1), lambda i, t: (i, 0, 0)),
            pl.BlockSpec((1, c, 1), lambda i, t: (i, 0, 0)),
        ),
        compiler_params=pltpu.CompilerParams(
            dimension_semantics=("parallel", "arbitrary"),
            vmem_limit_bytes=_vmem_limit(2 * tile_bytes + 16 * c, vmem_cap),
        ),
    )(x3d)

    # ---- Tiny O(C^2) glue: batch stats + fold BN into the compactor ----
    count = jnp.float32(n * hw)
    ch_sum = part_sum.sum(axis=0)[:, 0]                       # (C,)
    ch_sq = part_sq.sum(axis=0)[:, 0]                         # (C,)
    mean = ch_sum / count
    # TODO(synk): one-pass E[x^2]-E[x]^2 in f32 can cancel for |mean| >> std; use a
    # shifted/two-pass variance if this feeds training-critical statistics.
    var = jnp.maximum(ch_sq / count - mean * mean, 0.0)
    inv_std = jax.lax.rsqrt(var + eps)
    scale = bn_gamma.astype(jnp.float32) * inv_std            # (C,)
    shift = bn_beta.astype(jnp.float32) - mean * scale        # (C,)

    w2d = compactor_weight.reshape(c, c).astype(jnp.float32)  # (C_out, C_in)
    w_fold = (w2d * scale[None, :]).astype(mxu_dtype)         # fold BN scale
    b_fold = (w2d @ shift).reshape(c, 1)                      # fold BN shift (f32)

    # ---- Pass B: tiled normalize+conv == single matmul + bias per tile ----
    out3d = pl.pallas_call(
        _compact_kernel,
        out_shape=jax.ShapeDtypeStruct((n, c, hw), x_nchw.dtype),
        grid=(n, num_t),
        in_specs=[
            pl.BlockSpec((1, c, hw_tile), lambda i, t: (i, 0, t)),
            pl.BlockSpec((c, c), lambda i, t: (0, 0)),
            pl.BlockSpec((c, 1), lambda i, t: (0, 0)),
        ],
        out_specs=pl.BlockSpec((1, c, hw_tile), lambda i, t: (i, 0, t)),
        compiler_params=pltpu.CompilerParams(
            dimension_semantics=("parallel", "parallel"),
            # Budget counts double-buffering of x, out AND the weight/bias blocks.
            vmem_limit_bytes=_vmem_limit(
                4 * tile_bytes + 2 * w_bytes + 2 * c * 4, vmem_cap),
        ),
    )(x3d, w_fold, b_fold)

    return out3d.reshape(n, c, h, w)


# ------------------------------ reference -----------------------------------
def _reference_forward(x_nchw, bn_gamma, bn_beta, compactor_weight):
    mean = jnp.mean(x_nchw, axis=(0, 2, 3), keepdims=True)
    var = jnp.mean((x_nchw - mean) ** 2, axis=(0, 2, 3), keepdims=True)
    xn = (x_nchw - mean) / jnp.sqrt(var + _BN_EPS)
    xn = xn * bn_gamma.reshape(1, -1, 1, 1) + bn_beta.reshape(1, -1, 1, 1)
    w = compactor_weight.reshape(compactor_weight.shape[0], compactor_weight.shape[1])
    return jnp.einsum("nchw,oc->nohw", xn, w)


if __name__ == "__main__":
    key = jax.random.PRNGKey(0)
    N, C, H, W = 2, 4, 16, 16

    x = jax.random.normal(key, (N, C, H, W), dtype=jnp.float32)

    # Deterministic params matching InsertCompactor.__init__:
    #   BatchNorm2d(C): weight=1, bias=0; compactor = identity (C, C, 1, 1), no bias.
    bn_gamma = jnp.ones((C,), dtype=jnp.float32)
    bn_beta = jnp.zeros((C,), dtype=jnp.float32)
    compactor_weight = jnp.eye(C, dtype=jnp.float32).reshape(C, C, 1, 1)

    out = insert_compactor_forward(x, bn_gamma, bn_beta, compactor_weight)
    out = jax.block_until_ready(out)

    ref = _reference_forward(x, bn_gamma, bn_beta, compactor_weight)
    assert out.shape == (N, C, H, W)
    assert jnp.allclose(out, ref, atol=1e-4, rtol=1e-4), (
        float(jnp.max(jnp.abs(out - ref))))

    print("KERNEL_OK")
</pallas_src>

<mosaic_0001>
module attributes {stable_mosaic.version = 11 : i64} {
  func.func @_stats_kernel(%arg0: i32, %arg1: i32, %arg2: memref<1x4x256xf32, #tpu.memory_space<vmem>>, %arg3: memref<1x4x1xf32, #tpu.memory_space<vmem>>, %arg4: memref<1x4x1xf32, #tpu.memory_space<vmem>>) attributes {dimension_semantics = [#tpu.dimension_semantics<parallel>, #tpu.dimension_semantics<arbitrary>], iteration_bounds = array<i64: 2, 1>, scalar_prefetch = 0 : i64, scratch_operands = 0 : i64, tpu.core_type = #tpu.core_type<tc>, window_params = [{transform_indices = @transform_0, window_bounds = array<i64: 1, 4, 256>}, {transform_indices = @transform_1, window_bounds = array<i64: 1, 4, 1>}, {transform_indices = @transform_2, window_bounds = array<i64: 1, 4, 1>}]} {
    %c0_i32 = arith.constant 0 : i32
    %0 = arith.cmpi eq, %arg1, %c0_i32 : i32
    %1 = arith.extui %0 : i1 to i32
    %c0_i32_0 = arith.constant 0 : i32
    %2 = arith.cmpi ne, %1, %c0_i32_0 : i32
    scf.if %2 {
      %cst_16 = arith.constant 0.000000e+00 : f32
      %22 = vector.broadcast %cst_16 : f32 to vector<1x4x1xf32>
      %c0_17 = arith.constant 0 : index
      %c0_18 = arith.constant 0 : index
      %c0_19 = arith.constant 0 : index
      %23 = vector.load %arg3[%c0_17, %c0_18, %c0_19] : memref<1x4x1xf32, #tpu.memory_space<vmem>>, vector<1x4x1xf32>
      tpu.vector_store %arg3[%c0_17, %c0_18, %c0_19], %22 {strides = array<i32>} : memref<1x4x1xf32, #tpu.memory_space<vmem>>, vector<1x4x1xf32>,
      %cst_20 = arith.constant 0.000000e+00 : f32
      %24 = vector.broadcast %cst_20 : f32 to vector<1x4x1xf32>
      %c0_21 = arith.constant 0 : index
      %c0_22 = arith.constant 0 : index
      %c0_23 = arith.constant 0 : index
      %25 = vector.load %arg4[%c0_21, %c0_22, %c0_23] : memref<1x4x1xf32, #tpu.memory_space<vmem>>, vector<1x4x1xf32>
      tpu.vector_store %arg4[%c0_21, %c0_22, %c0_23], %24 {strides = array<i32>} : memref<1x4x1xf32, #tpu.memory_space<vmem>>, vector<1x4x1xf32>,
    } else {
    }
    %c0 = arith.constant 0 : index
    %c0_1 = arith.constant 0 : index
    %c0_2 = arith.constant 0 : index
    %3 = vector.load %arg2[%c0, %c0_1, %c0_2] : memref<1x4x256xf32, #tpu.memory_space<vmem>>, vector<1x4x256xf32>
    %4 = vector.shape_cast %3 : vector<1x4x256xf32> to vector<4x256xf32>
    %c0_3 = arith.constant 0 : index
    %c0_4 = arith.constant 0 : index
    %c0_5 = arith.constant 0 : index
    %5 = vector.load %arg3[%c0_3, %c0_4, %c0_5] : memref<1x4x1xf32, #tpu.memory_space<vmem>>, vector<1x4x1xf32>
    %6 = vector.shape_cast %5 : vector<1x4x1xf32> to vector<4x1xf32>
    %cst = arith.constant dense<0.000000e+00> : vector<4xf32>
    %7 = vector.multi_reduction <add>, %4, %cst [1] : vector<4x256xf32> to vector<4xf32>
    %8 = vector.shape_cast %7 : vector<4xf32> to vector<4x1xf32>
    %9 = arith.addf %6, %8 : vector<4x1xf32>
    %c0_6 = arith.constant 0 : index
    %c0_7 = arith.constant 0 : index
    %c0_8 = arith.constant 0 : index
    %10 = vector.load %arg3[%c0_6, %c0_7, %c0_8] : memref<1x4x1xf32, #tpu.memory_space<vmem>>, vector<1x4x1xf32>
    %11 = vector.shape_cast %10 : vector<1x4x1xf32> to vector<4x1xf32>
    %12 = vector.shape_cast %9 : vector<4x1xf32> to vector<1x4x1xf32>
    tpu.vector_store %arg3[%c0_6, %c0_7, %c0_8], %12 {strides = array<i32>} : memref<1x4x1xf32, #tpu.memory_space<vmem>>, vector<1x4x1xf32>,
    %c0_9 = arith.constant 0 : index
    %c0_10 = arith.constant 0 : index
    %c0_11 = arith.constant 0 : index
    %13 = vector.load %arg4[%c0_9, %c0_10, %c0_11] : memref<1x4x1xf32, #tpu.memory_space<vmem>>, vector<1x4x1xf32>
    %14 = vector.shape_cast %13 : vector<1x4x1xf32> to vector<4x1xf32>
    %15 = arith.mulf %4, %4 : vector<4x256xf32>
    %cst_12 = arith.constant dense<0.000000e+00> : vector<4xf32>
    %16 = vector.multi_reduction <add>, %15, %cst_12 [1] : vector<4x256xf32> to vector<4xf32>
    %17 = vector.shape_cast %16 : vector<4xf32> to vector<4x1xf32>
    %18 = arith.addf %14, %17 : vector<4x1xf32>
    %c0_13 = arith.constant 0 : index
    %c0_14 = arith.constant 0 : index
    %c0_15 = arith.constant 0 : index
    %19 = vector.load %arg4[%c0_13, %c0_14, %c0_15] : memref<1x4x1xf32, #tpu.memory_space<vmem>>, vector<1x4x1xf32>
    %20 = vector.shape_cast %19 : vector<1x4x1xf32> to vector<4x1xf32>
    %21 = vector.shape_cast %18 : vector<4x1xf32> to vector<1x4x1xf32>
    tpu.vector_store %arg4[%c0_13, %c0_14, %c0_15], %21 {strides = array<i32>} : memref<1x4x1xf32, #tpu.memory_space<vmem>>, vector<1x4x1xf32>,
    return
  }
  func.func @transform_0(%arg0: i32, %arg1: i32) -> (i32, i32, i32) {
    %c0_i32 = arith.constant 0 : i32
    %c0_i32_0 = arith.constant 0 : i32
    return %arg0, %c0_i32, %arg1 : i32, i32, i32
  }
  func.func @transform_1(%arg0: i32, %arg1: i32) -> (i32, i32, i32) {
    %c0_i32 = arith.constant 0 : i32
    %c0_i32_0 = arith.constant 0 : i32
    %c0_i32_1 = arith.constant 0 : i32
    return %arg0, %c0_i32, %c0_i32_0 : i32, i32, i32
  }
  func.func @transform_2(%arg0: i32, %arg1: i32) -> (i32, i32, i32) {
    %c0_i32 = arith.constant 0 : i32
    %c0_i32_0 = arith.constant 0 : i32
    %c0_i32_1 = arith.constant 0 : i32
    return %arg0, %c0_i32, %c0_i32_0 : i32, i32, i32
  }
}

</mosaic_0001>

<llo_original>
// kernel: tpu_custom_call.1
$region0: #{tpu_custom_call.1}
  #allocation0 [shape = 'u32[]', space=smem, size = 0x4, offset = 0x4, fixed_abs, tag = 'smem constant byte address 0x4 - core index']
  #allocation1 [shape = 'u32[72,128]{1,0:T(1,128)}', space=vmem, size = 0x9000, scoped, tag = 'internal scratch']
  %s0 = inlined_call_operand.hbm [shape: f32[2,4,256], index: 0, kind: input, shape index: {}]
  %s1 = inlined_call_operand.vmem [shape: f32[2,4,1], index: 1, kind: output, shape index: {0}]
  %s2 = inlined_call_operand.vmem [shape: f32[2,4,1], index: 2, kind: output, shape index: {1}]
  %3 = xla_tuple %s1, %s2
  %s4 = sld [smem:[#allocation0]]
  $region53: #{tpu_custom_call.1} parent=0
    _
  %s6 = ssub.s32 1, %s4
  %s7 = scalar_select 0, %s6, %s4
  $region1: #{tpu_custom_call.1} parent=0
    #allocation2 [shape = 'u8[8192]{0}', space=vmem, size = 0x2000, scoped, tag = 'input window, operand 0']
    #allocation3 [shape = 's32[2]{0}', space=sflag, size = 0x8, scoped, tag = 'scoped memory for tpu_custom_call.1']
    %8 = vsyncpa [#allocation3], 0
    %s9 = scalar_lea.sflag [#allocation3], 1
    %10 = vsyncpa %s9, 0
    loop: start=0, step=1, limit=4
    $region2: #{tpu_custom_call.1} parent=1 // loop_pre_header
      _
    $region3: #{tpu_custom_call.1} parent=1 // loop_header
      %s12 = sphi 0, %s16
      %p13 = scmp.ge.s32.totalorder %s12, 4
      %s19 = sphi 0, %s31
      %s20 = sphi 0, %s27
      %s21 = sphi 0, %s19
      %s22 = sphi 0, %s20
      %s23 = sphi 0, %s21
      %s24 = sphi 0, %s22
      %s36 = sphi 0, %s38
      %s39 = sphi 0, %s36
      %s40 = sphi 0, %s39
      %s56 = sphi 0, %s40
      %s62 = sphi 0, %s64
      %s65 = sphi 0, %s62
      %s66 = sphi 0, %s65
      %s82 = sphi 0, %s66
      %s88 = sphi 0, %s90
      %s91 = sphi 0, %s88
      %s92 = sphi 0, %s91
      %s108 = sphi 0, %s92
    $region4: #{tpu_custom_call.1} parent=1 // loop_header_branch
      %15 = sbr.rel (%p13) target = $region8
    $region5: #{tpu_custom_call.1} parent=1 // loop_body
      %s17 = ssub.s32 %s12, 1
      %s18 = ssub.s32 %s12, 2
      %s25 = sadd.s32 1, %s20
      %p26 = scmp.ge.s32.totalorder %s25, 1
      %s27 = scalar_select %p26, 0, %s25
      %s28 = sadd.s32 1, %s19
      %s29 = scalar_select %p26, %s28, %s19
      %p30 = scmp.ge.s32.totalorder %s29, 2
      %s31 = scalar_select %p30, 0, %s29
      %s32 = ssub.s32 %s19, %s31
      %s33 = ssub.s32 %s20, %s27
      %s34 = sor.u32 %s32, %s33
      %p35 = scmp.eq.s32.totalorder %s34, 0
      %s37 = sadd.s32 %s36, 1
      %s38 = scalar_select %p35, %s36, %s37
      %p41 = pneg %p35
      %p42 = scmp.eq.s32.totalorder %s12, 1
      %p43 = por %p41, %p42
      %p44 = scmp.ne.s32.totalorder %s36, %s39
      %p45 = scmp.eq.s32.totalorder %s12, 0
      %p46 = por %p44, %p45
      %p47 = scmp.ne.s32.totalorder %s36, %s39
      %p48 = scmp.eq.s32.totalorder %s17, 1
      %p49 = por %p47, %p48
      %p50 = scmp.ne.s32.totalorder %s39, %s40
      %p51 = scmp.eq.s32.totalorder %s17, 0
      %p52 = por %p50, %p51
      %p53 = scmp.ne.s32.totalorder %s39, %s40
      %p54 = scmp.eq.s32.totalorder %s18, 1
      %p55 = por %p53, %p54
      %p57 = scmp.ne.s32.totalorder %s40, %s56
      %p58 = scmp.eq.s32.totalorder %s18, 0
      %p59 = por %p57, %p58
      %s60 = ssub.s32 %s19, %s31
      %p61 = scmp.eq.s32.totalorder %s60, 0
      %s63 = sadd.s32 %s62, 1
      %s64 = scalar_select %p61, %s62, %s63
      %p67 = pneg %p61
      %p68 = scmp.eq.s32.totalorder %s12, 1
      %p69 = por %p67, %p68
      %p70 = scmp.ne.s32.totalorder %s62, %s65
      %p71 = scmp.eq.s32.totalorder %s12, 0
      %p72 = por %p70, %p71
      %p73 = scmp.ne.s32.totalorder %s62, %s65
      %p74 = scmp.eq.s32.totalorder %s17, 1
      %p75 = por %p73, %p74
      %p76 = scmp.ne.s32.totalorder %s65, %s66
      %p77 = scmp.eq.s32.totalorder %s17, 0
      %p78 = por %p76, %p77
      %p79 = scmp.ne.s32.totalorder %s65, %s66
      %p80 = scmp.eq.s32.totalorder %s18, 1
      %p81 = por %p79, %p80
      %p83 = scmp.ne.s32.totalorder %s66, %s82
      %p84 = scmp.eq.s32.totalorder %s18, 0
      %p85 = por %p83, %p84
      %s86 = ssub.s32 %s19, %s31
      %p87 = scmp.eq.s32.totalorder %s86, 0
      %s89 = sadd.s32 %s88, 1
      %s90 = scalar_select %p87, %s88, %s89
      %p93 = pneg %p87
      %p94 = scmp.eq.s32.totalorder %s12, 1
      %p95 = por %p93, %p94
      %p96 = scmp.ne.s32.totalorder %s88, %s91
      %p97 = scmp.eq.s32.totalorder %s12, 0
      %p98 = por %p96, %p97
      %p99 = scmp.ne.s32.totalorder %s88, %s91
      %p100 = scmp.eq.s32.totalorder %s17, 1
      %p101 = por %p99, %p100
      %p102 = scmp.ne.s32.totalorder %s91, %s92
      %p103 = scmp.eq.s32.totalorder %s17, 0
      %p104 = por %p102, %p103
      %p105 = scmp.ne.s32.totalorder %s91, %s92
      %p106 = scmp.eq.s32.totalorder %s18, 1
      %p107 = por %p105, %p106
      %p109 = scmp.ne.s32.totalorder %s92, %s108
      %p110 = scmp.eq.s32.totalorder %s18, 0
      %p111 = por %p109, %p110
      %p112 = scmp.le.s32.totalorder 1, %s12
      %p113 = scmp.lt.s32.totalorder %s12, 3
      %p114 = pnand %p112, %p113
      %p115 = pneg %p114
      // Predicated region
      $region9: #{tpu_custom_call.1} parent=5 // pred_check
        _
      $region10: #{tpu_custom_call.1} parent=5 // pred_check_branch
        %117 = sbr.rel (%p114) target = $region12
      $region11: #{tpu_custom_call.1} parent=5 // pred_region
        %s118 = ssub.s32 %s12, 1
      $region12: #{tpu_custom_call.1} parent=5 // pred_fallthru
        _
      %p119 = scmp.lt.s32.totalorder %s12, 2
      // Predicated region
      $region13: #{tpu_custom_call.1} parent=5 // pred_check
        %p120 = pneg %p119
      $region14: #{tpu_custom_call.1} parent=5 // pred_check_branch
        %122 = sbr.rel (%p120) target = $region16
      $region15: #{tpu_custom_call.1} parent=5 // pred_region
        // Predicated region
        $region17: #{tpu_custom_call.1} parent=15 // pred_check
          %p123 = pneg %p46
        $region18: #{tpu_custom_call.1} parent=15 // pred_check_branch
          %125 = sbr.rel (%p123) target = $region20
        $region19: #{tpu_custom_call.1} parent=15 // pred_region
          %s126 = sand.u32 %s36, 1
          %s127 = scalar_lea.sflag [#allocation3], %s126
          %s128 = sand.u32 %s36, 1
          %s129 = smul.addr %s128, 8
          %s130 = scalar_lea.vmem [#allocation2], %s129
          %s131 = smul.u32 2, %s20
          %133 = vsyncadd %s127, 0
          %s134 = smul.addr %s19, 2
          %s135 = sadd.s32 %s131, %s134
          %s136 = smul.addr %s135, 4
          %s137 = scalar_lea.hbm %s0, %s136
          %s139 = sshll.u32 %s137, 4
          %s140 = int_to_ptr.hbm [resolvable:$true] %s139
          %s141 = sshll.u32 %s130, 4
          %s142 = int_to_ptr.vmem [resolvable:$true] %s141
          %144 = dma.hbm_to_vmem [thread:$0]  %s140, 128, %s142, %s127
        $region20: #{tpu_custom_call.1} parent=15 // pred_fallthru
          _
      $region16: #{tpu_custom_call.1} parent=5 // pred_fallthru
        _
      %p145 = scmp.le.s32.totalorder 1, %s12
      %p146 = scmp.lt.s32.totalorder %s12, 3
      %p147 = pnand %p145, %p146
      %p148 = pneg %p147
      // Predicated region
      $region21: #{tpu_custom_call.1} parent=5 // pred_check
        _
      $region22: #{tpu_custom_call.1} parent=5 // pred_check_branch
        %150 = sbr.rel (%p147) target = $region24
      $region23: #{tpu_custom_call.1} parent=5 // pred_region
        %s151 = ssub.s32 %s12, 1
        %s152 = sand.u32 %s39, 1
        %s153 = scalar_lea.sflag [#allocation3], %s152
        %s154 = sand.u32 %s39, 1
        %s155 = smul.addr %s154, 8
        %s156 = scalar_lea.vmem [#allocation2], %s155
        // Predicated region
        $region25: #{tpu_custom_call.1} parent=23 // pred_check
          %p157 = pneg %p52
        $region26: #{tpu_custom_call.1} parent=23 // pred_check_branch
          %159 = sbr.rel (%p157) target = $region28
        $region27: #{tpu_custom_call.1} parent=23 // pred_region
          %161 = dma.done %s153, 128
        $region28: #{tpu_custom_call.1} parent=23 // pred_fallthru
          _
        %s162 = sand.u32 %s39, 1
        %s163 = scalar_lea.sflag [#allocation3], %s162
        %s164 = sand.u32 %s39, 1
        %s165 = smul.addr %s164, 8
        %s166 = scalar_lea.vmem [#allocation2], %s165
        %p167 = pneg %p52
        %p168 = pneg %p49
        %p169 = pneg %p78
        %p170 = pneg %p75
        %p171 = scmp.lt.s32.totalorder %s21, 1
        %s172 = scalar_select %p171, %s21, 1
        %s173 = smul.addr %s172, 4
        %s174 = scalar_lea.vmem %s1, %s173
        %p175 = pneg %p104
        %p176 = pneg %p101
        %p177 = scmp.lt.s32.totalorder %s21, 1
        %s178 = scalar_select %p177, %s21, 1
        %s179 = smul.addr %s178, 4
        %s180 = scalar_lea.vmem %s2, %s179
        %s181 = smul.u32 2, %s22
        %p182 = scmp.lt.s32.totalorder %s21, 1
        %s183 = scalar_select %p182, %s21, 1
        %s184 = smul.addr %s183, 4
        %s185 = scalar_lea.vmem %s1, %s184
        %p186 = scmp.lt.s32.totalorder %s21, 1
        %s187 = scalar_select %p186, %s21, 1
        %s188 = smul.addr %s187, 4
        %s189 = scalar_lea.vmem %s2, %s188
        %p190 = scmp.eq.s32.totalorder %s22, 0
        // Predicated region
        $region29: #{tpu_custom_call.1} parent=23 // pred_check
          %p191 = pneg %p190
        $region30: #{tpu_custom_call.1} parent=23 // pred_check_branch
          %193 = sbr.rel (%p191) target = $region32
        $region31: #{tpu_custom_call.1} parent=23 // pred_region
          %vm194 = vcmask 3072
          %195 = vst.msk [vmem:[%s185] sm:$0xf] %vm194, 0.0
          %196 = vst.msk [vmem:[%s189] sm:$0xf] %vm194, 0.0
        $region32: #{tpu_custom_call.1} parent=23 // pred_fallthru
          _
        %v197 = vld [vmem:[%s156] sm:$0xff]
        %v198 = vld [vmem:[%s185] sm:$0xf]
        %200 = vst [vmem:[#allocation1] ss:$2 sm:$0xff] %v197
        %v201 = vld.sshfl [vmem:[#allocation1] sm:$0xff pattern:$0x75316420]
        %v202 = vld.sshfl [vmem:[#allocation1 + $0x8] sm:$0xff pattern:$0x75316420]
        %vm205 = vcmask 1043456
        %v206 = vsel %vm205, %v201, 0.0
        %v207 = vsel %vm205, %v202, 0.0
        %v208 = vadd.f32 %v206, %v207
        %209 = vadd.xlane.f32.xlu0 %v208
        %v210 = vpop.xlane.xlu0 %209
        %v211 = vadd.f32 %v198, %v210
        %vm212 = vcmask 3072
        %213 = vst.msk [vmem:[%s185] sm:$0xf] %vm212, %v211
        %v214 = vld [vmem:[%s189] sm:$0xf]
        %v215 = vmul.f32 %v197, %v197
        %217 = vst [vmem:[#allocation1] ss:$2 sm:$0xff] %v215
        %v218 = vld.sshfl [vmem:[#allocation1] sm:$0xff pattern:$0x75316420]
        %v219 = vld.sshfl [vmem:[#allocation1 + $0x8] sm:$0xff pattern:$0x75316420]
        %v222 = vsel %vm205, %v218, 0.0
        %v223 = vsel %vm205, %v219, 0.0
        %v224 = vadd.f32 %v222, %v223
        %225 = vadd.xlane.f32.xlu0 %v224
        %v226 = vpop.xlane.xlu0 %225
        %v227 = vadd.f32 %v214, %v226
        %228 = vst.msk [vmem:[%s189] sm:$0xf] %vm212, %v227
        %p229 = scmp.lt.s32.totalorder %s21, 1
        %s230 = scalar_select %p229, %s21, 1
        %s231 = smul.addr %s230, 4
        %s232 = scalar_lea.vmem %s1, %s231
        %p233 = scmp.lt.s32.totalorder %s21, 1
        %s234 = scalar_select %p233, %s21, 1
        %s235 = smul.addr %s234, 4
        %s236 = scalar_lea.vmem %s2, %s235
        // Predicated region
        $region33: #{tpu_custom_call.1} parent=23 // pred_check
          %p237 = pneg %p75
        $region34: #{tpu_custom_call.1} parent=23 // pred_check_branch
          %239 = sbr.rel (%p237) target = $region36
        $region35: #{tpu_custom_call.1} parent=23 // pred_region
          _
        $region36: #{tpu_custom_call.1} parent=23 // pred_fallthru
          _
        // Predicated region
        $region37: #{tpu_custom_call.1} parent=23 // pred_check
          %p240 = pneg %p101
        $region38: #{tpu_custom_call.1} parent=23 // pred_check_branch
          %242 = sbr.rel (%p240) target = $region40
        $region39: #{tpu_custom_call.1} parent=23 // pred_region
          _
        $region40: #{tpu_custom_call.1} parent=23 // pred_fallthru
          _
      $region24: #{tpu_custom_call.1} parent=5 // pred_fallthru
        _
      %p243 = scmp.le.s32.totalorder 2, %s12
      // Predicated region
      $region41: #{tpu_custom_call.1} parent=5 // pred_check
        %p244 = pneg %p243
      $region42: #{tpu_custom_call.1} parent=5 // pred_check_branch
        %246 = sbr.rel (%p244) target = $region44
      $region43: #{tpu_custom_call.1} parent=5 // pred_region
        %s247 = ssub.s32 %s12, 2
        // Predicated region
        $region45: #{tpu_custom_call.1} parent=43 // pred_check
          %p248 = pneg %p81
        $region46: #{tpu_custom_call.1} parent=43 // pred_check_branch
          %250 = sbr.rel (%p248) target = $region48
        $region47: #{tpu_custom_call.1} parent=43 // pred_region
          %p251 = scmp.lt.s32.totalorder %s23, 1
          %s252 = scalar_select %p251, %s23, 1
          %s253 = smul.addr %s252, 4
          %s254 = scalar_lea.vmem %s1, %s253
        $region48: #{tpu_custom_call.1} parent=43 // pred_fallthru
          _
        // Predicated region
        $region49: #{tpu_custom_call.1} parent=43 // pred_check
          %p255 = pneg %p107
        $region50: #{tpu_custom_call.1} parent=43 // pred_check_branch
          %257 = sbr.rel (%p255) target = $region52
        $region51: #{tpu_custom_call.1} parent=43 // pred_region
          %p258 = scmp.lt.s32.totalorder %s23, 1
          %s259 = scalar_select %p258, %s23, 1
          %s260 = smul.addr %s259, 4
          %s261 = scalar_lea.vmem %s2, %s260
        $region52: #{tpu_custom_call.1} parent=43 // pred_fallthru
          _
      $region44: #{tpu_custom_call.1} parent=5 // pred_fallthru
        _
    $region6: #{tpu_custom_call.1} parent=1 // loop_footer
      %s16 = sadd.s32 1, %s12
    $region7: #{tpu_custom_call.1} parent=1 // loop_footer_branch
      %11 = sbr.rel target = $region3
    $region8: #{tpu_custom_call.1} parent=1 // loop_exit
      _
    %262 = vsyncpa [#allocation3], 1
    %s263 = scalar_lea.sflag [#allocation3], 1
    %264 = vsyncpa %s263, 1

</llo_original>
